<compile_context>
chip_gen: v6e
topology: v6e:2x2x1
jax: 0.10.0
libtpu: 0.0.40
codegen_flags: <defaults>
</compile_context>

<pallas_src>
import functools

import jax
import jax.numpy as jnp
from jax.experimental import pallas as pl
from jax.experimental.pallas import tpu as pltpu


def _round_up(x, m):
    return (x + m - 1) // m * m


def _chip_defaults():
    """(scoped-VMEM budget in bytes, preferred adj row-tile) per chip generation."""
    kind = jax.devices()[0].device_kind.lower()
    if "v7" in kind:
        return 48 * 1024 * 1024, 256      # 64 MiB physical VMEM -> keep headroom
    if "v6" in kind:
        return 96 * 1024 * 1024, 256      # 256-wide MXU
    if "v5e" in kind or "v5 lite" in kind or "v5lite" in kind:
        return 96 * 1024 * 1024, 128      # 128-wide MXU
    return 64 * 1024 * 1024, 128          # conservative default for other chips


def _make_fused_kernel(n_layers):
    """All n_layers in ONE kernel; activations ping-pong through VMEM scratch."""

    def kernel(adj_ref, x_ref, w_ref, o_ref, *scratch):
        def layer(x_f32):
            # (N,N)@(N,F) then (N,F)@(F,Fo); bf16 MXU inputs, f32 accumulation.
            h = jnp.dot(adj_ref[...], x_f32.astype(jnp.bfloat16),
                        preferred_element_type=jnp.float32)
            return jnp.dot(h.astype(jnp.bfloat16), w_ref[...],
                           preferred_element_type=jnp.float32)

        if n_layers == 1:
            o_ref[...] = layer(x_ref[...])
            return

        xbuf = scratch[0]                               # (n_buf, N, Fo) f32
        xbuf[0] = layer(x_ref[...])                     # layer 0
        for l in range(1, n_layers - 1):                # middle layers (n_layers is small & static)
            xbuf[l % 2] = layer(xbuf[(l - 1) % 2])
        o_ref[...] = layer(xbuf[(n_layers - 2) % 2])    # last layer -> output

    return kernel


def _tiled_layer_kernel(adj_ref, x_ref, w_ref, o_ref):
    """One GCN layer for one row tile: out_tile = (adj_tile @ X) @ W."""
    h = jnp.dot(adj_ref[...], x_ref[...].astype(jnp.bfloat16),
                preferred_element_type=jnp.float32)
    o_ref[...] = jnp.dot(h.astype(jnp.bfloat16), w_ref[...],
                         preferred_element_type=jnp.float32)


def prepare_gcn_operands(adj, W):
    """Pad to MXU-friendly multiples of 128 and cast to bf16.

    Hoisted out of the forward hot path: when adj is reused across many forward
    calls, this O(N^2) pad + cast is paid once instead of per call.
    Zero padding is mathematically exact for this layer.
    """
    N = adj.shape[0]
    f_in, f_out = W.shape
    n_pad = _round_up(N, 128)
    fi_pad = _round_up(f_in, 128)
    fo_pad = _round_up(f_out, 128)
    adj_p = jnp.pad(adj, ((0, n_pad - N), (0, n_pad - N))).astype(jnp.bfloat16)
    w_p = jnp.pad(W, ((0, fi_pad - f_in), (0, fo_pad - f_out))).astype(jnp.bfloat16)
    return adj_p, w_p


@functools.partial(jax.jit,
                   static_argnames=("n_layers", "out_features", "force_tiled"))
def gcn_forward(input_feature, adj_p, w_p, *, n_layers, out_features,
                force_tiled=False):
    """GraphConvolution.forward on pre-padded bf16 adj_p / w_p."""
    N, f_in = input_feature.shape
    n_pad = adj_p.shape[0]
    fi_pad, fo_pad = w_p.shape
    assert adj_p.shape == (n_pad, n_pad)
    assert n_pad >= N and fi_pad >= f_in and fo_pad >= out_features
    if n_layers > 1:
        # The module is only well-formed for n_layers > 1 when W is square.
        assert fi_pad == fo_pad

    # X stays float32 (cheap: only N*F) -> no inter-layer re-quantization.
    x_p = jnp.pad(input_feature.astype(jnp.float32),
                  ((0, n_pad - N), (0, fi_pad - f_in)))

    vmem_budget, mxu_tile = _chip_defaults()
    n_buf = 0 if n_layers == 1 else (1 if n_layers == 2 else 2)

    # Conservative VMEM estimate for the fused (everything-resident) path:
    # pipeline double-buffers in/out + ping-pong scratch + per-layer intermediate.
    fused_bytes = (2 * n_pad * n_pad * 2            # adj (bf16)
                   + 2 * n_pad * fi_pad * 4         # X in (f32)
                   + 2 * fi_pad * fo_pad * 2        # W (bf16)
                   + 2 * n_pad * fo_pad * 4         # out (f32)
                   + n_buf * n_pad * fo_pad * 4     # ping-pong scratch (f32)
                   + n_pad * max(fi_pad, fo_pad) * 4)
    use_fused = (not force_tiled) and fused_bytes <= int(0.75 * vmem_budget)

    if use_fused:
        scratch = ([] if n_buf == 0
                   else [pltpu.VMEM((n_buf, n_pad, fo_pad), jnp.float32)])
        out_p = pl.pallas_call(
            _make_fused_kernel(n_layers),
            out_shape=jax.ShapeDtypeStruct((n_pad, fo_pad), jnp.float32),
            grid=(1,),
            in_specs=[
                pl.BlockSpec((n_pad, n_pad), lambda i: (0, 0)),     # adj (resident)
                pl.BlockSpec((n_pad, fi_pad), lambda i: (0, 0)),    # X0
                pl.BlockSpec((fi_pad, fo_pad), lambda i: (0, 0)),   # W (resident)
            ],
            out_specs=pl.BlockSpec((n_pad, fo_pad), lambda i: (0, 0)),
            scratch_shapes=scratch,
            compiler_params=pltpu.CompilerParams(
                dimension_semantics=("arbitrary",),
                vmem_limit_bytes=vmem_budget),
        )(adj_p, x_p, w_p)
    else:
        # Row-tiled fallback: one pallas_call per layer (every row of layer l+1
        # needs ALL rows of layer l, so layers cannot be row-parallel-fused).
        tm = mxu_tile if (n_pad % mxu_tile == 0) else 128
        tm = min(tm, n_pad)
        grid = (n_pad // tm,)
        # TODO(synk): for very large N on v7x add a K-tiled accumulator path
        # (second 'arbitrary' grid axis over n_pad chunks + f32 VMEM acc) and
        # single-buffer the grid-invariant X/W specs (pipeline_mode=pl.Buffered(1))
        # to halve their VMEM footprint.
        layer_call = pl.pallas_call(
            _tiled_layer_kernel,
            out_shape=jax.ShapeDtypeStruct((n_pad, fo_pad), jnp.float32),
            grid=grid,
            in_specs=[
                pl.BlockSpec((tm, n_pad), lambda i: (i, 0)),        # adj row tile
                pl.BlockSpec((n_pad, fi_pad), lambda i: (0, 0)),    # full X (resident)
                pl.BlockSpec((fi_pad, fo_pad), lambda i: (0, 0)),   # full W (resident)
            ],
            out_specs=pl.BlockSpec((tm, fo_pad), lambda i: (i, 0)),
            compiler_params=pltpu.CompilerParams(
                dimension_semantics=("parallel",),
                vmem_limit_bytes=vmem_budget),
        )
        out_p = x_p
        for _ in range(n_layers):
            out_p = layer_call(adj_p, out_p, w_p)

    return out_p[:N, :out_features].astype(input_feature.dtype)


def graph_convolution(input_feature, adj, W, n_layers):
    """One-shot convenience wrapper (prepare + forward)."""
    assert adj.shape[0] == adj.shape[1] == input_feature.shape[0]
    assert W.shape[0] == input_feature.shape[1]
    if n_layers > 1:
        assert W.shape[0] == W.shape[1]
    adj_p, w_p = prepare_gcn_operands(adj, W)
    return gcn_forward(input_feature, adj_p, w_p,
                       n_layers=n_layers, out_features=W.shape[1])


def _xavier_uniform(key, shape, gain):
    fan_in, fan_out = shape
    bound = gain * jnp.sqrt(6.0 / (fan_in + fan_out))
    return jax.random.uniform(key, shape, jnp.float32, -bound, bound)


def _matched_precision_ref(x, adj, W, n_layers):
    """Reference with the kernel's exact precision policy (bf16 adj/W, f32 X/acc)."""
    adj_b = adj.astype(jnp.bfloat16)
    w_b = W.astype(jnp.bfloat16)
    xr = x.astype(jnp.float32)
    for _ in range(n_layers):
        h = jnp.dot(adj_b, xr.astype(jnp.bfloat16),
                    preferred_element_type=jnp.float32)
        xr = jnp.dot(h.astype(jnp.bfloat16), w_b,
                     preferred_element_type=jnp.float32)
    return xr


if __name__ == "__main__":
    # Small, deterministic example shapes.
    N = 128          # number of graph nodes
    F = 32           # in_features == out_features (required for n_layers > 1)
    n_layers = 3

    key = jax.random.PRNGKey(0)
    k_w, k_x, k_a, k_x2, k_a2 = jax.random.split(key, 5)

    # Parameter init matches nn.init.xavier_uniform_(W, gain=1.414).
    W = _xavier_uniform(k_w, (F, F), gain=1.414)

    input_feature = jax.random.normal(k_x, (N, F), dtype=jnp.float32)
    # Symmetric, row-normalized adjacency (typical GCN input).
    a = jax.random.uniform(k_a, (N, N), dtype=jnp.float32)
    a = (a + a.T) * 0.5 + jnp.eye(N, dtype=jnp.float32)
    adj = a / jnp.sum(a, axis=1, keepdims=True)

    # Pad/cast hoisted out of the hot path; adj_p / w_p are reusable across calls.
    adj_p, w_p = prepare_gcn_operands(adj, W)
    out = gcn_forward(input_feature, adj_p, w_p, n_layers=n_layers, out_features=F)
    out = jax.block_until_ready(out)
    assert out.shape == (N, F)

    # 1) Tight check vs matched-precision reference (validates the kernel itself).
    ref_m = _matched_precision_ref(input_feature, adj, W, n_layers)
    assert jnp.allclose(out, ref_m, rtol=2e-2, atol=1e-3), \
        "mismatch vs matched-precision reference (fused path)"

    # 2) Loose check vs the float32 module reference (kernel rounds adj/W to bf16).
    ref = input_feature
    for _ in range(n_layers):
        ref = jnp.matmul(jnp.matmul(adj, ref), W)
    assert jnp.allclose(out, ref, rtol=5e-2, atol=5e-3), \
        "mismatch vs float32 reference"

    # Also exercise the row-tiled large-graph fallback path once.
    N2 = 256
    x2 = jax.random.normal(k_x2, (N2, F), dtype=jnp.float32)
    a2 = jax.random.uniform(k_a2, (N2, N2), dtype=jnp.float32)
    a2 = (a2 + a2.T) * 0.5 + jnp.eye(N2, dtype=jnp.float32)
    adj2 = a2 / jnp.sum(a2, axis=1, keepdims=True)
    adj2_p, w2_p = prepare_gcn_operands(adj2, W)
    out2 = gcn_forward(x2, adj2_p, w2_p, n_layers=2, out_features=F,
                       force_tiled=True)
    out2 = jax.block_until_ready(out2)
    assert out2.shape == (N2, F)
    ref2_m = _matched_precision_ref(x2, adj2, W, 2)
    assert jnp.allclose(out2, ref2_m, rtol=2e-2, atol=1e-3), \
        "mismatch vs matched-precision reference (tiled path)"

    print("KERNEL_OK")
</pallas_src>

<mosaic_0001>
module attributes {stable_mosaic.version = 11 : i64} {
  func.func @kernel(%arg0: i32, %arg1: memref<128x128xbf16, #tpu.memory_space<vmem>>, %arg2: memref<128x128xf32, #tpu.memory_space<vmem>>, %arg3: memref<128x128xbf16, #tpu.memory_space<vmem>>, %arg4: memref<128x128xf32, #tpu.memory_space<vmem>>, %arg5: memref<2x128x128xf32, #tpu.memory_space<vmem>>) attributes {dimension_semantics = [#tpu.dimension_semantics<arbitrary>], iteration_bounds = array<i64: 1>, scalar_prefetch = 0 : i64, scratch_operands = 1 : i64, tpu.core_type = #tpu.core_type<tc>, window_params = [{pipeline_mode = #tpu.pipeline_mode<synchronous>, transform_indices = @transform_0, window_bounds = array<i64: 128, 128>}, {pipeline_mode = #tpu.pipeline_mode<synchronous>, transform_indices = @transform_1, window_bounds = array<i64: 128, 128>}, {pipeline_mode = #tpu.pipeline_mode<synchronous>, transform_indices = @transform_2, window_bounds = array<i64: 128, 128>}, {pipeline_mode = #tpu.pipeline_mode<synchronous>, transform_indices = @transform_3, window_bounds = array<i64: 128, 128>}]} {
    %c0 = arith.constant 0 : index
    %c0_0 = arith.constant 0 : index
    %0 = vector.load %arg2[%c0, %c0_0] : memref<128x128xf32, #tpu.memory_space<vmem>>, vector<128x128xf32>
    %c0_1 = arith.constant 0 : index
    %c0_2 = arith.constant 0 : index
    %1 = vector.load %arg1[%c0_1, %c0_2] : memref<128x128xbf16, #tpu.memory_space<vmem>>, vector<128x128xbf16>
    %2 = arith.truncf %0 : vector<128x128xf32> to vector<128x128xbf16>
    %cst = arith.constant dense<0.000000e+00> : vector<128x128xf32>
    %3 = tpu.matmul %1, %2, %cst {dimension_numbers = #tpu.dot_dimension_numbers<[1], [0], [0], [1], [0, 0, 1, 1], [], []>} : vector<128x128xbf16>, vector<128x128xbf16>, vector<128x128xf32> -> vector<128x128xf32>
    %4 = arith.truncf %3 : vector<128x128xf32> to vector<128x128xbf16>
    %c0_3 = arith.constant 0 : index
    %c0_4 = arith.constant 0 : index
    %5 = vector.load %arg3[%c0_3, %c0_4] : memref<128x128xbf16, #tpu.memory_space<vmem>>, vector<128x128xbf16>
    %cst_5 = arith.constant dense<0.000000e+00> : vector<128x128xf32>
    %6 = tpu.matmul %4, %5, %cst_5 {dimension_numbers = #tpu.dot_dimension_numbers<[1], [0], [0], [1], [0, 0, 1, 1], [], []>} : vector<128x128xbf16>, vector<128x128xbf16>, vector<128x128xf32> -> vector<128x128xf32>
    %c0_6 = arith.constant 0 : index
    %c0_7 = arith.constant 0 : index
    %c0_8 = arith.constant 0 : index
    %7 = vector.load %arg5[%c0_6, %c0_7, %c0_8] : memref<2x128x128xf32, #tpu.memory_space<vmem>>, vector<1x128x128xf32>
    %8 = vector.shape_cast %7 : vector<1x128x128xf32> to vector<128x128xf32>
    %9 = vector.shape_cast %6 : vector<128x128xf32> to vector<1x128x128xf32>
    tpu.vector_store %arg5[%c0_6, %c0_7, %c0_8], %9 {strides = array<i32>} : memref<2x128x128xf32, #tpu.memory_space<vmem>>, vector<1x128x128xf32>,
    %c0_9 = arith.constant 0 : index
    %c0_10 = arith.constant 0 : index
    %c0_11 = arith.constant 0 : index
    %10 = vector.load %arg5[%c0_9, %c0_10, %c0_11] : memref<2x128x128xf32, #tpu.memory_space<vmem>>, vector<1x128x128xf32>
    %11 = vector.shape_cast %10 : vector<1x128x128xf32> to vector<128x128xf32>
    %c0_12 = arith.constant 0 : index
    %c0_13 = arith.constant 0 : index
    %12 = vector.load %arg1[%c0_12, %c0_13] : memref<128x128xbf16, #tpu.memory_space<vmem>>, vector<128x128xbf16>
    %13 = arith.truncf %11 : vector<128x128xf32> to vector<128x128xbf16>
    %cst_14 = arith.constant dense<0.000000e+00> : vector<128x128xf32>
    %14 = tpu.matmul %12, %13, %cst_14 {dimension_numbers = #tpu.dot_dimension_numbers<[1], [0], [0], [1], [0, 0, 1, 1], [], []>} : vector<128x128xbf16>, vector<128x128xbf16>, vector<128x128xf32> -> vector<128x128xf32>
    %15 = arith.truncf %14 : vector<128x128xf32> to vector<128x128xbf16>
    %c0_15 = arith.constant 0 : index
    %c0_16 = arith.constant 0 : index
    %16 = vector.load %arg3[%c0_15, %c0_16] : memref<128x128xbf16, #tpu.memory_space<vmem>>, vector<128x128xbf16>
    %cst_17 = arith.constant dense<0.000000e+00> : vector<128x128xf32>
    %17 = tpu.matmul %15, %16, %cst_17 {dimension_numbers = #tpu.dot_dimension_numbers<[1], [0], [0], [1], [0, 0, 1, 1], [], []>} : vector<128x128xbf16>, vector<128x128xbf16>, vector<128x128xf32> -> vector<128x128xf32>
    %c1 = arith.constant 1 : index
    %c0_18 = arith.constant 0 : index
    %c0_19 = arith.constant 0 : index
    %18 = vector.load %arg5[%c1, %c0_18, %c0_19] : memref<2x128x128xf32, #tpu.memory_space<vmem>>, vector<1x128x128xf32>
    %19 = vector.shape_cast %18 : vector<1x128x128xf32> to vector<128x128xf32>
    %20 = vector.shape_cast %17 : vector<128x128xf32> to vector<1x128x128xf32>
    tpu.vector_store %arg5[%c1, %c0_18, %c0_19], %20 {strides = array<i32>} : memref<2x128x128xf32, #tpu.memory_space<vmem>>, vector<1x128x128xf32>,
    %c1_20 = arith.constant 1 : index
    %c0_21 = arith.constant 0 : index
    %c0_22 = arith.constant 0 : index
    %21 = vector.load %arg5[%c1_20, %c0_21, %c0_22] : memref<2x128x128xf32, #tpu.memory_space<vmem>>, vector<1x128x128xf32>
    %22 = vector.shape_cast %21 : vector<1x128x128xf32> to vector<128x128xf32>
    %c0_23 = arith.constant 0 : index
    %c0_24 = arith.constant 0 : index
    %23 = vector.load %arg1[%c0_23, %c0_24] : memref<128x128xbf16, #tpu.memory_space<vmem>>, vector<128x128xbf16>
    %24 = arith.truncf %22 : vector<128x128xf32> to vector<128x128xbf16>
    %cst_25 = arith.constant dense<0.000000e+00> : vector<128x128xf32>
    %25 = tpu.matmul %23, %24, %cst_25 {dimension_numbers = #tpu.dot_dimension_numbers<[1], [0], [0], [1], [0, 0, 1, 1], [], []>} : vector<128x128xbf16>, vector<128x128xbf16>, vector<128x128xf32> -> vector<128x128xf32>
    %26 = arith.truncf %25 : vector<128x128xf32> to vector<128x128xbf16>
    %c0_26 = arith.constant 0 : index
    %c0_27 = arith.constant 0 : index
    %27 = vector.load %arg3[%c0_26, %c0_27] : memref<128x128xbf16, #tpu.memory_space<vmem>>, vector<128x128xbf16>
    %cst_28 = arith.constant dense<0.000000e+00> : vector<128x128xf32>
    %28 = tpu.matmul %26, %27, %cst_28 {dimension_numbers = #tpu.dot_dimension_numbers<[1], [0], [0], [1], [0, 0, 1, 1], [], []>} : vector<128x128xbf16>, vector<128x128xbf16>, vector<128x128xf32> -> vector<128x128xf32>
    %c0_29 = arith.constant 0 : index
    %c0_30 = arith.constant 0 : index
    %29 = vector.load %arg4[%c0_29, %c0_30] : memref<128x128xf32, #tpu.memory_space<vmem>>, vector<128x128xf32>
    tpu.vector_store %arg4[%c0_29, %c0_30], %28 {strides = array<i32>} : memref<128x128xf32, #tpu.memory_space<vmem>>, vector<128x128xf32>,
    return
  }
  func.func @transform_0(%arg0: i32) -> (i32, i32) {
    %c0_i32 = arith.constant 0 : i32
    %c0_i32_0 = arith.constant 0 : i32
    %c0_i32_1 = arith.constant 0 : i32
    return %c0_i32, %c0_i32_0 : i32, i32
  }
  func.func @transform_1(%arg0: i32) -> (i32, i32) {
    %c0_i32 = arith.constant 0 : i32
    %c0_i32_0 = arith.constant 0 : i32
    %c0_i32_1 = arith.constant 0 : i32
    return %c0_i32, %c0_i32_0 : i32, i32
  }
  func.func @transform_2(%arg0: i32) -> (i32, i32) {
    %c0_i32 = arith.constant 0 : i32
    %c0_i32_0 = arith.constant 0 : i32
    %c0_i32_1 = arith.constant 0 : i32
    return %c0_i32, %c0_i32_0 : i32, i32
  }
  func.func @transform_3(%arg0: i32) -> (i32, i32) {
    %c0_i32 = arith.constant 0 : i32
    %c0_i32_0 = arith.constant 0 : i32
    %c0_i32_1 = arith.constant 0 : i32
    return %c0_i32, %c0_i32_0 : i32, i32
  }
}

</mosaic_0001>

<llo_original>
// kernel: gcn_forward.1
$region0: #{gcn_forward.1}
  #allocation0 [shape = 'u32[]', space=smem, size = 0x4, offset = 0x4, fixed_abs, tag = 'smem constant byte address 0x4 - core index']
  #allocation1 [shape = 'u32[144,128]{1,0:T(1,128)}', space=vmem, size = 0x12000, scoped, tag = 'internal scratch']
  #allocation2 [shape = 'f32[2,128,128]{2,1,0:T(8,128)}', space=vmem, size = 0x20000, scoped, tag = 'scratch operand']
  %s0 = inlined_call_operand.vmem [shape: bf16[128,128], index: 0, kind: input, shape index: {}]
  %s1 = inlined_call_operand.vmem [shape: f32[128,128], index: 1, kind: input, shape index: {}]
  %s2 = inlined_call_operand.vmem [shape: bf16[128,128], index: 2, kind: input, shape index: {}]
  %s3 = inlined_call_operand.vmem [shape: f32[128,128], index: 3, kind: output, shape index: {}]
  %s4 = sld [smem:[#allocation0]]
  $region22: #{gcn_forward.1} parent=0
    _
  %s6 = ssub.s32 1, %s4
  %s7 = scalar_select 0, %s6, %s4
  // Predicated region
  $region2: #{gcn_forward.1} parent=0 // pred_check
    _
  $region3: #{gcn_forward.1} parent=0 // pred_check_branch
    %9 = sbr.rel (0) target = $region5
  $region4: #{gcn_forward.1} parent=0 // pred_region
    _
  $region5: #{gcn_forward.1} parent=0 // pred_fallthru
    _
  // Predicated region
  $region6: #{gcn_forward.1} parent=0 // pred_check
    _
  $region7: #{gcn_forward.1} parent=0 // pred_check_branch
    %11 = sbr.rel (0) target = $region9
  $region8: #{gcn_forward.1} parent=0 // pred_region
    _
  $region9: #{gcn_forward.1} parent=0 // pred_fallthru
    _
  // Predicated region
  $region10: #{gcn_forward.1} parent=0 // pred_check
    _
  $region11: #{gcn_forward.1} parent=0 // pred_check_branch
    %13 = sbr.rel (0) target = $region13
  $region12: #{gcn_forward.1} parent=0 // pred_region
    _
  $region13: #{gcn_forward.1} parent=0 // pred_fallthru
    _
  %v15 = vld [vmem:[%s1] sm:$0xff]
  %v16 = vld [vmem:[%s1 + $0x8] sm:$0xff]
  %v17 = vld [vmem:[%s1 + $0x10] sm:$0xff]
  %v18 = vld [vmem:[%s1 + $0x18] sm:$0xff]
  %v19 = vld [vmem:[%s1 + $0x20] sm:$0xff]
  %v20 = vld [vmem:[%s1 + $0x28] sm:$0xff]
  %v21 = vld [vmem:[%s1 + $0x30] sm:$0xff]
  %v22 = vld [vmem:[%s1 + $0x38] sm:$0xff]
  %v23 = vld [vmem:[%s1 + $0x40] sm:$0xff]
  %v24 = vld [vmem:[%s1 + $0x48] sm:$0xff]
  %v25 = vld [vmem:[%s1 + $0x50] sm:$0xff]
  %v26 = vld [vmem:[%s1 + $0x58] sm:$0xff]
  %v27 = vld [vmem:[%s1 + $0x60] sm:$0xff]
  %v28 = vld [vmem:[%s1 + $0x68] sm:$0xff]
  %v29 = vld [vmem:[%s1 + $0x70] sm:$0xff]
  %v30 = vld [vmem:[%s1 + $0x78] sm:$0xff]
  %v31 = vld [vmem:[%s0] sm:$0xf]
  %v32 = vld [vmem:[%s0 + $0x4] sm:$0xf]
  %v33 = vld [vmem:[%s0 + $0x8] sm:$0xf]
  %v34 = vld [vmem:[%s0 + $0xc] sm:$0xf]
  %v35 = vld [vmem:[%s0 + $0x10] sm:$0xf]
  %v36 = vld [vmem:[%s0 + $0x14] sm:$0xf]
  %v37 = vld [vmem:[%s0 + $0x18] sm:$0xf]
  %v38 = vld [vmem:[%s0 + $0x1c] sm:$0xf]
  %v39 = vld [vmem:[%s0 + $0x20] sm:$0xf]
  %v40 = vld [vmem:[%s0 + $0x24] sm:$0xf]
  %v41 = vld [vmem:[%s0 + $0x28] sm:$0xf]
  %v42 = vld [vmem:[%s0 + $0x2c] sm:$0xf]
  %v43 = vld [vmem:[%s0 + $0x30] sm:$0xf]
  %v44 = vld [vmem:[%s0 + $0x34] sm:$0xf]
  %v45 = vld [vmem:[%s0 + $0x38] sm:$0xf]
  %v46 = vld [vmem:[%s0 + $0x3c] sm:$0xf]
  %v47 = vpack.c.bf16 %v16, %v15
  %v48 = vpack.c.bf16 %v18, %v17
  %v49 = vpack.c.bf16 %v20, %v19
  %v50 = vpack.c.bf16 %v22, %v21
  %v51 = vpack.c.bf16 %v24, %v23
  %v52 = vpack.c.bf16 %v26, %v25
  %v53 = vpack.c.bf16 %v28, %v27
  %v54 = vpack.c.bf16 %v30, %v29
  %v71 = vunpack.c.l.b16 %v31
  %v72 = vunpack.c.l.b16 %v32
  %v73 = vunpack.c.l.b16 %v33
  %v74 = vunpack.c.l.b16 %v34
  %v75 = vunpack.c.l.b16 %v35
  %v76 = vunpack.c.l.b16 %v36
  %v77 = vunpack.c.l.b16 %v37
  %v78 = vunpack.c.l.b16 %v38
  %v79 = vunpack.c.l.b16 %v39
  %v80 = vunpack.c.l.b16 %v40
  %v81 = vunpack.c.l.b16 %v41
  %v82 = vunpack.c.l.b16 %v42
  %v83 = vunpack.c.l.b16 %v43
  %v84 = vunpack.c.l.b16 %v44
  %v85 = vunpack.c.l.b16 %v45
  %v86 = vunpack.c.l.b16 %v46
  %v87 = vpack.c.b16 %v72, %v71
  %v88 = vpack.c.b16 %v74, %v73
  %v89 = vpack.c.b16 %v76, %v75
  %v90 = vpack.c.b16 %v78, %v77
  %v91 = vpack.c.b16 %v80, %v79
  %v92 = vpack.c.b16 %v82, %v81
  %v93 = vpack.c.b16 %v84, %v83
  %v94 = vpack.c.b16 %v86, %v85
  %103 = vmatprep.subr.bf16.mxu0 0
  %104 = vmatpush1.bf16.msra.mxu0 %v54
  %105 = vmatprep.subr.bf16.mxu0 0
  %106 = vmatpush1.bf16.msra.mxu0 %v53
  %107 = vmatprep.subr.bf16.mxu0 0
  %108 = vmatpush1.bf16.msra.mxu0 %v52
  %109 = vmatprep.subr.bf16.mxu0 0
  %110 = vmatpush1.bf16.msra.mxu0 %v51
  %111 = vmatprep.subr.bf16.mxu0 0
  %112 = vmatpush1.bf16.msra.mxu0 %v50
  %113 = vmatprep.subr.bf16.mxu0 0
  %114 = vmatpush1.bf16.msra.mxu0 %v49
  %115 = vmatprep.subr.bf16.mxu0 0
  %116 = vmatpush1.bf16.msra.mxu0 %v48
  %117 = vmatprep.subr.bf16.mxu0 0
  %118 = vmatpush1.bf16.msra.mxu0 %v47
  %119 = vmatprep.subr.bf16.mxu0 0
  %120 = vmatpush2.bf16.msra.mxu0 0
  %121 = vmatprep.subr.bf16.mxu0 0
  %122 = vmatpush2.bf16.msra.mxu0 0
  %123 = vmatprep.subr.bf16.mxu0 0
  %124 = vmatpush2.bf16.msra.mxu0 0
  %125 = vmatprep.subr.bf16.mxu0 0
  %126 = vmatpush2.bf16.msra.mxu0 0
  %127 = vmatprep.subr.bf16.mxu0 0
  %128 = vmatpush2.bf16.msra.mxu0 0
  %129 = vmatprep.subr.bf16.mxu0 0
  %130 = vmatpush2.bf16.msra.mxu0 0
  %131 = vmatprep.subr.bf16.mxu0 0
  %132 = vmatpush2.bf16.msra.mxu0 0
  %133 = vmatprep.subr.bf16.mxu0 0
  %134 = vmatpush2.bf16.msra.mxu0 0
  %135 = vmatprep.mubr.bf16.mxu0 0
  %136 = vmatmul.mubr.bf16.gmra.mxu0 %v87
  %v137 = vpop.f32.mrf.mxu0
  %v138 = vadd.f32 0.0, %v137
  %v139 = vpop.f32.mrf.mxu0
  %v140 = vpop.f32.mrf.mxu0
  %v141 = vadd.f32 0.0, %v140
  %v142 = vpop.f32.mrf.mxu0
  %143 = vmatprep.mubr.bf16.mxu0 0
  %144 = vmatmul.mubr.bf16.gmra.mxu0 %v88
  %v145 = vpop.f32.mrf.mxu0
  %v146 = vadd.f32 0.0, %v145
  %v147 = vpop.f32.mrf.mxu0
  %v148 = vpop.f32.mrf.mxu0
  %v149 = vadd.f32 0.0, %v148
  %v150 = vpop.f32.mrf.mxu0
  %151 = vmatprep.mubr.bf16.mxu0 0
  %152 = vmatmul.mubr.bf16.gmra.mxu0 %v89
  %v153 = vpop.f32.mrf.mxu0
  %v154 = vadd.f32 0.0, %v153
  %v155 = vpop.f32.mrf.mxu0
  %v156 = vpop.f32.mrf.mxu0
  %v157 = vadd.f32 0.0, %v156
  %v158 = vpop.f32.mrf.mxu0
  %159 = vmatprep.mubr.bf16.mxu0 0
  %160 = vmatmul.mubr.bf16.gmra.mxu0 %v90
  %v161 = vpop.f32.mrf.mxu0
  %v162 = vadd.f32 0.0, %v161
  %v163 = vpop.f32.mrf.mxu0
  %v164 = vpop.f32.mrf.mxu0
  %v165 = vadd.f32 0.0, %v164
  %v166 = vpop.f32.mrf.mxu0
  %167 = vmatprep.mubr.bf16.mxu0 0
  %168 = vmatmul.mubr.bf16.gmra.mxu0 %v91
  %v169 = vpop.f32.mrf.mxu0
  %v170 = vadd.f32 0.0, %v169
  %v171 = vpop.f32.mrf.mxu0
  %v172 = vpop.f32.mrf.mxu0
  %v173 = vadd.f32 0.0, %v172
  %v174 = vpop.f32.mrf.mxu0
  %175 = vmatprep.mubr.bf16.mxu0 0
  %176 = vmatmul.mubr.bf16.gmra.mxu0 %v92
  %v177 = vpop.f32.mrf.mxu0
  %v178 = vadd.f32 0.0, %v177
  %v179 = vpop.f32.mrf.mxu0
  %v180 = vpop.f32.mrf.mxu0
  %v181 = vadd.f32 0.0, %v180
  %v182 = vpop.f32.mrf.mxu0
  %183 = vmatprep.mubr.bf16.mxu0 0
  %184 = vmatmul.mubr.bf16.gmra.mxu0 %v93
  %v185 = vpop.f32.mrf.mxu0
  %v186 = vadd.f32 0.0, %v185
  %v187 = vpop.f32.mrf.mxu0
  %v188 = vpop.f32.mrf.mxu0
  %v189 = vadd.f32 0.0, %v188
  %v190 = vpop.f32.mrf.mxu0
  %191 = vmatprep.mubr.bf16.mxu0 0
  %192 = vmatmul.mubr.bf16.gmra.mxu0 %v94
  %v193 = vpop.f32.mrf.mxu0
  %v194 = vadd.f32 0.0, %v193
  %v195 = vpop.f32.mrf.mxu0
  %v196 = vpop.f32.mrf.mxu0
  %v197 = vadd.f32 0.0, %v196
  %v198 = vpop.f32.mrf.mxu0
  %199 = vdwg.mxu0
  %v200 = vpack.c.bf16 %v141, %v138
  %v201 = vpack.c.bf16 %v149, %v146
  %v202 = vpack.c.bf16 %v157, %v154
  %v203 = vpack.c.bf16 %v165, %v162
  %v204 = vpack.c.bf16 %v173, %v170
  %v205 = vpack.c.bf16 %v181, %v178
  %v206 = vpack.c.bf16 %v189, %v186
  %v207 = vpack.c.bf16 %v197, %v194
  %v208 = vld [vmem:[%s2] sm:$0xf]
  %v209 = vld [vmem:[%s2 + $0x4] sm:$0xf]
  %v210 = vld [vmem:[%s2 + $0x8] sm:$0xf]
  %v211 = vld [vmem:[%s2 + $0xc] sm:$0xf]
  %v212 = vld [vmem:[%s2 + $0x10] sm:$0xf]
  %v213 = vld [vmem:[%s2 + $0x14] sm:$0xf]
  %v214 = vld [vmem:[%s2 + $0x18] sm:$0xf]
  %v215 = vld [vmem:[%s2 + $0x1c] sm:$0xf]
  %v216 = vld [vmem:[%s2 + $0x20] sm:$0xf]
  %v217 = vld [vmem:[%s2 + $0x24] sm:$0xf]
  %v218 = vld [vmem:[%s2 + $0x28] sm:$0xf]
  %v219 = vld [vmem:[%s2 + $0x2c] sm:$0xf]
  %v220 = vld [vmem:[%s2 + $0x30] sm:$0xf]
  %v221 = vld [vmem:[%s2 + $0x34] sm:$0xf]
  %v222 = vld [vmem:[%s2 + $0x38] sm:$0xf]
  %v223 = vld [vmem:[%s2 + $0x3c] sm:$0xf]
  %v240 = vunpack.c.l.b16 %v208
  %v241 = vunpack.c.l.b16 %v209
  %v242 = vunpack.c.l.b16 %v210
  %v243 = vunpack.c.l.b16 %v211
  %v244 = vunpack.c.l.b16 %v212
  %v245 = vunpack.c.l.b16 %v213
  %v246 = vunpack.c.l.b16 %v214
  %v247 = vunpack.c.l.b16 %v215
  %v248 = vunpack.c.l.b16 %v216
  %v249 = vunpack.c.l.b16 %v217
  %v250 = vunpack.c.l.b16 %v218
  %v251 = vunpack.c.l.b16 %v219
  %v252 = vunpack.c.l.b16 %v220
  %v253 = vunpack.c.l.b16 %v221
  %v254 = vunpack.c.l.b16 %v222
  %v255 = vunpack.c.l.b16 %v223
  %v256 = vpack.c.b16 %v241, %v240
  %v257 = vpack.c.b16 %v243, %v242
  %v258 = vpack.c.b16 %v245, %v244
  %v259 = vpack.c.b16 %v247, %v246
  %v260 = vpack.c.b16 %v249, %v248
  %v261 = vpack.c.b16 %v251, %v250
  %v262 = vpack.c.b16 %v253, %v252
  %v263 = vpack.c.b16 %v255, %v254
  %272 = vmatprep.subr.bf16.mxu0 0
  %273 = vmatpush1.bf16.msra.mxu0 %v263
  %274 = vmatprep.subr.bf16.mxu0 0
  %275 = vmatpush1.bf16.msra.mxu0 %v262
  %276 = vmatprep.subr.bf16.mxu0 0
  %277 = vmatpush1.bf16.msra.mxu0 %v261
  %278 = vmatprep.subr.bf16.mxu0 0
  %279 = vmatpush1.bf16.msra.mxu0 %v260
  %280 = vmatprep.subr.bf16.mxu0 0
  %281 = vmatpush1.bf16.msra.mxu0 %v259
  %282 = vmatprep.subr.bf16.mxu0 0
  %283 = vmatpush1.bf16.msra.mxu0 %v258
  %284 = vmatprep.subr.bf16.mxu0 0
  %285 = vmatpush1.bf16.msra.mxu0 %v257
  %286 = vmatprep.subr.bf16.mxu0 0
  %287 = vmatpush1.bf16.msra.mxu0 %v256
  %288 = vmatprep.subr.bf16.mxu0 0
  %289 = vmatpush2.bf16.msra.mxu0 0
  %290 = vmatprep.subr.bf16.mxu0 0
  %291 = vmatpush2.bf16.msra.mxu0 0
  %292 = vmatprep.subr.bf16.mxu0 0
  %293 = vmatpush2.bf16.msra.mxu0 0
  %294 = vmatprep.subr.bf16.mxu0 0
  %295 = vmatpush2.bf16.msra.mxu0 0
  %296 = vmatprep.subr.bf16.mxu0 0
  %297 = vmatpush2.bf16.msra.mxu0 0
  %298 = vmatprep.subr.bf16.mxu0 0
  %299 = vmatpush2.bf16.msra.mxu0 0
  %300 = vmatprep.subr.bf16.mxu0 0
  %301 = vmatpush2.bf16.msra.mxu0 0
  %302 = vmatprep.subr.bf16.mxu0 0
  %303 = vmatpush2.bf16.msra.mxu0 0
  %304 = vmatprep.mubr.bf16.mxu0 0
  %305 = vmatmul.mubr.bf16.gmra.mxu0 %v200
  %v306 = vpop.f32.mrf.mxu0
  %v307 = vadd.f32 0.0, %v306
  %v308 = vpop.f32.mrf.mxu0
  %v309 = vpop.f32.mrf.mxu0
  %v310 = vadd.f32 0.0, %v309
  %v311 = vpop.f32.mrf.mxu0
  %312 = vmatprep.mubr.bf16.mxu0 0
  %313 = vmatmul.mubr.bf16.gmra.mxu0 %v201
  %v314 = vpop.f32.mrf.mxu0
  %v315 = vadd.f32 0.0, %v314
  %v316 = vpop.f32.mrf.mxu0
  %v317 = vpop.f32.mrf.mxu0
  %v318 = vadd.f32 0.0, %v317
  %v319 = vpop.f32.mrf.mxu0
  %320 = vmatprep.mubr.bf16.mxu0 0
  %321 = vmatmul.mubr.bf16.gmra.mxu0 %v202
  %v322 = vpop.f32.mrf.mxu0
  %v323 = vadd.f32 0.0, %v322
  %v324 = vpop.f32.mrf.mxu0
  %v325 = vpop.f32.mrf.mxu0
  %v326 = vadd.f32 0.0, %v325
  %v327 = vpop.f32.mrf.mxu0
  %328 = vmatprep.mubr.bf16.mxu0 0
  %329 = vmatmul.mubr.bf16.gmra.mxu0 %v203
  %v330 = vpop.f32.mrf.mxu0
  %v331 = vadd.f32 0.0, %v330
  %v332 = vpop.f32.mrf.mxu0
  %v333 = vpop.f32.mrf.mxu0
  %v334 = vadd.f32 0.0, %v333
  %v335 = vpop.f32.mrf.mxu0
  %336 = vmatprep.mubr.bf16.mxu0 0
  %337 = vmatmul.mubr.bf16.gmra.mxu0 %v204
  %v338 = vpop.f32.mrf.mxu0
  %v339 = vadd.f32 0.0, %v338
  %v340 = vpop.f32.mrf.mxu0
  %v341 = vpop.f32.mrf.mxu0
  %v342 = vadd.f32 0.0, %v341
  %v343 = vpop.f32.mrf.mxu0
  %344 = vmatprep.mubr.bf16.mxu0 0
  %345 = vmatmul.mubr.bf16.gmra.mxu0 %v205
  %v346 = vpop.f32.mrf.mxu0
  %v347 = vadd.f32 0.0, %v346
  %v348 = vpop.f32.mrf.mxu0
  %v349 = vpop.f32.mrf.mxu0
  %v350 = vadd.f32 0.0, %v349
  %v351 = vpop.f32.mrf.mxu0
  %352 = vmatprep.mubr.bf16.mxu0 0
  %353 = vmatmul.mubr.bf16.gmra.mxu0 %v206
  %v354 = vpop.f32.mrf.mxu0
  %v355 = vadd.f32 0.0, %v354
  %v356 = vpop.f32.mrf.mxu0
  %v357 = vpop.f32.mrf.mxu0
  %v358 = vadd.f32 0.0, %v357
  %v359 = vpop.f32.mrf.mxu0
  %360 = vmatprep.mubr.bf16.mxu0 0
  %361 = vmatmul.mubr.bf16.gmra.mxu0 %v207
  %v362 = vpop.f32.mrf.mxu0
  %v363 = vadd.f32 0.0, %v362
  %v364 = vpop.f32.mrf.mxu0
  %v365 = vpop.f32.mrf.mxu0
  %v366 = vadd.f32 0.0, %v365
  %v367 = vpop.f32.mrf.mxu0
  %368 = vdwg.mxu0
  %369 = vst [vmem:[#allocation2] sm:$0xff] %v307
  %370 = vst [vmem:[#allocation2 + $0x8] sm:$0xff] %v310
  %371 = vst [vmem:[#allocation2 + $0x10] sm:$0xff] %v315
  %372 = vst [vmem:[#allocation2 + $0x18] sm:$0xff] %v318
  %373 = vst [vmem:[#allocation2 + $0x20] sm:$0xff] %v323
  %374 = vst [vmem:[#allocation2 + $0x28] sm:$0xff] %v326
  %375 = vst [vmem:[#allocation2 + $0x30] sm:$0xff] %v331
  %376 = vst [vmem:[#allocation2 + $0x38] sm:$0xff] %v334
  %377 = vst [vmem:[#allocation2 + $0x40] sm:$0xff] %v339
  %378 = vst [vmem:[#allocation2 + $0x48] sm:$0xff] %v342
  %379 = vst [vmem:[#allocation2 + $0x50] sm:$0xff] %v347
  %380 = vst [vmem:[#allocation2 + $0x58] sm:$0xff] %v350
  %381 = vst [vmem:[#allocation2 + $0x60] sm:$0xff] %v355
  %382 = vst [vmem:[#allocation2 + $0x68] sm:$0xff] %v358
  %383 = vst [vmem:[#allocation2 + $0x70] sm:$0xff] %v363
  %384 = vst [vmem:[#allocation2 + $0x78] sm:$0xff] %v366
  %v385 = vld [vmem:[#allocation2] sm:$0xff]
  %v386 = vld [vmem:[#allocation2 + $0x8] sm:$0xff]
  %v387 = vld [vmem:[#allocation2 + $0x10] sm:$0xff]
  %v388 = vld [vmem:[#allocation2 + $0x18] sm:$0xff]
  %v389 = vld [vmem:[#allocation2 + $0x20] sm:$0xff]
  %v390 = vld [vmem:[#allocation2 + $0x28] sm:$0xff]
  %v391 = vld [vmem:[#allocation2 + $0x30] sm:$0xff]
  %v392 = vld [vmem:[#allocation2 + $0x38] sm:$0xff]
  %v393 = vld [vmem:[#allocation2 + $0x40] sm:$0xff]
  %v394 = vld [vmem:[#allocation2 + $0x48] sm:$0xff]
  %v395 = vld [vmem:[#allocation2 + $0x50] sm:$0xff]
  %v396 = vld [vmem:[#allocation2 + $0x58] sm:$0xff]
  %v397 = vld [vmem:[#allocation2 + $0x60] sm:$0xff]
  %v398 = vld [vmem:[#allocation2 + $0x68] sm:$0xff]
  %v399 = vld [vmem:[#allocation2 + $0x70] sm:$0xff]
  %v400 = vld [vmem:[#allocation2 + $0x78] sm:$0xff]
  %v401 = vld [vmem:[%s0] sm:$0xf]
  %v402 = vld [vmem:[%s0 + $0x4] sm:$0xf]
  %v403 = vld [vmem:[%s0 + $0x8] sm:$0xf]
  %v404 = vld [vmem:[%s0 + $0xc] sm:$0xf]
  %v405 = vld [vmem:[%s0 + $0x10] sm:$0xf]
  %v406 = vld [vmem:[%s0 + $0x14] sm:$0xf]
  %v407 = vld [vmem:[%s0 + $0x18] sm:$0xf]
  %v408 = vld [vmem:[%s0 + $0x1c] sm:$0xf]
  %v409 = vld [vmem:[%s0 + $0x20] sm:$0xf]
  %v410 = vld [vmem:[%s0 + $0x24] sm:$0xf]
  %v411 = vld [vmem:[%s0 + $0x28] sm:$0xf]
  %v412 = vld [vmem:[%s0 + $0x2c] sm:$0xf]
  %v413 = vld [vmem:[%s0 + $0x30] sm:$0xf]
  %v414 = vld [vmem:[%s0 + $0x34] sm:$0xf]
  %v415 = vld [vmem:[%s0 + $0x38] sm:$0xf]
  %v416 = vld [vmem:[%s0 + $0x3c] sm:$0xf]
  %v417 = vpack.c.bf16 %v386, %v385
  %v418 = vpack.c.bf16 %v388, %v387
  %v419 = vpack.c.bf16 %v390, %v389
  %v420 = vpack.c.bf16 %v392, %v391
  %v421 = vpack.c.bf16 %v394, %v393
  %v422 = vpack.c.bf16 %v396, %v395
  %v423 = vpack.c.bf16 %v398, %v397
  %v424 = vpack.c.bf16 %v400, %v399
  %v441 = vunpack.c.l.b16 %v401
  %v442 = vunpack.c.l.b16 %v402
  %v443 = vunpack.c.l.b16 %v403
  %v444 = vunpack.c.l.b16 %v404
  %v445 = vunpack.c.l.b16 %v405
  %v446 = vunpack.c.l.b16 %v406
  %v447 = vunpack.c.l.b16 %v407
  %v448 = vunpack.c.l.b16 %v408
  %v449 = vunpack.c.l.b16 %v409
  %v450 = vunpack.c.l.b16 %v410
  %v451 = vunpack.c.l.b16 %v411
  %v452 = vunpack.c.l.b16 %v412
  %v453 = vunpack.c.l.b16 %v413
  %v454 = vunpack.c.l.b16 %v414
  %v455 = vunpack.c.l.b16 %v415
  %v456 = vunpack.c.l.b16 %v416
  %v457 = vpack.c.b16 %v442, %v441
  %v458 = vpack.c.b16 %v444, %v443
  %v459 = vpack.c.b16 %v446, %v445
  %v460 = vpack.c.b16 %v448, %v447
  %v461 = vpack.c.b16 %v450, %v449
  %v462 = vpack.c.b16 %v452, %v451
  %v463 = vpack.c.b16 %v454, %v453
  %v464 = vpack.c.b16 %v456, %v455
  %473 = vmatprep.subr.bf16.mxu0 0
  %474 = vmatpush1.bf16.msra.mxu0 %v424
  %475 = vmatprep.subr.bf16.mxu0 0
  %476 = vmatpush1.bf16.msra.mxu0 %v423
  %477 = vmatprep.subr.bf16.mxu0 0
  %478 = vmatpush1.bf16.msra.mxu0 %v422
  %479 = vmatprep.subr.bf16.mxu0 0
  %480 = vmatpush1.bf16.msra.mxu0 %v421
  %481 = vmatprep.subr.bf16.mxu0 0
  %482 = vmatpush1.bf16.msra.mxu0 %v420
  %483 = vmatprep.subr.bf16.mxu0 0
  %484 = vmatpush1.bf16.msra.mxu0 %v419
  %485 = vmatprep.subr.bf16.mxu0 0
  %486 = vmatpush1.bf16.msra.mxu0 %v418
  %487 = vmatprep.subr.bf16.mxu0 0
  %488 = vmatpush1.bf16.msra.mxu0 %v417
  %489 = vmatprep.subr.bf16.mxu0 0
  %490 = vmatpush2.bf16.msra.mxu0 0
  %491 = vmatprep.subr.bf16.mxu0 0
  %492 = vmatpush2.bf16.msra.mxu0 0
  %493 = vmatprep.subr.bf16.mxu0 0
  %494 = vmatpush2.bf16.msra.mxu0 0
  %495 = vmatprep.subr.bf16.mxu0 0
  %496 = vmatpush2.bf16.msra.mxu0 0
  %497 = vmatprep.subr.bf16.mxu0 0
  %498 = vmatpush2.bf16.msra.mxu0 0
  %499 = vmatprep.subr.bf16.mxu0 0
  %500 = vmatpush2.bf16.msra.mxu0 0
  %501 = vmatprep.subr.bf16.mxu0 0
  %502 = vmatpush2.bf16.msra.mxu0 0
  %503 = vmatprep.subr.bf16.mxu0 0
  %504 = vmatpush2.bf16.msra.mxu0 0
  %505 = vmatprep.mubr.bf16.mxu0 0
  %506 = vmatmul.mubr.bf16.gmra.mxu0 %v457
  %v507 = vpop.f32.mrf.mxu0
  %v508 = vadd.f32 0.0, %v507
  %v509 = vpop.f32.mrf.mxu0
  %v510 = vpop.f32.mrf.mxu0
  %v511 = vadd.f32 0.0, %v510
  %v512 = vpop.f32.mrf.mxu0
  %513 = vmatprep.mubr.bf16.mxu0 0
  %514 = vmatmul.mubr.bf16.gmra.mxu0 %v458
  %v515 = vpop.f32.mrf.mxu0
  %v516 = vadd.f32 0.0, %v515
  %v517 = vpop.f32.mrf.mxu0
  %v518 = vpop.f32.mrf.mxu0
  %v519 = vadd.f32 0.0, %v518
  %v520 = vpop.f32.mrf.mxu0
  %521 = vmatprep.mubr.bf16.mxu0 0
  %522 = vmatmul.mubr.bf16.gmra.mxu0 %v459
  %v523 = vpop.f32.mrf.mxu0
  %v524 = vadd.f32 0.0, %v523
  %v525 = vpop.f32.mrf.mxu0
  %v526 = vpop.f32.mrf.mxu0
  %v527 = vadd.f32 0.0, %v526
  %v528 = vpop.f32.mrf.mxu0
  %529 = vmatprep.mubr.bf16.mxu0 0
  %530 = vmatmul.mubr.bf16.gmra.mxu0 %v460
  %v531 = vpop.f32.mrf.mxu0
  %v532 = vadd.f32 0.0, %v531
  %v533 = vpop.f32.mrf.mxu0
  %v534 = vpop.f32.mrf.mxu0
  %v535 = vadd.f32 0.0, %v534
  %v536 = vpop.f32.mrf.mxu0
  %537 = vmatprep.mubr.bf16.mxu0 0
  %538 = vmatmul.mubr.bf16.gmra.mxu0 %v461
  %v539 = vpop.f32.mrf.mxu0
  %v540 = vadd.f32 0.0, %v539
  %v541 = vpop.f32.mrf.mxu0
  %v542 = vpop.f32.mrf.mxu0
  %v543 = vadd.f32 0.0, %v542
  %v544 = vpop.f32.mrf.mxu0
  %545 = vmatprep.mubr.bf16.mxu0 0
  %546 = vmatmul.mubr.bf16.gmra.mxu0 %v462
  %v547 = vpop.f32.mrf.mxu0
  %v548 = vadd.f32 0.0, %v547
  %v549 = vpop.f32.mrf.mxu0
  %v550 = vpop.f32.mrf.mxu0
  %v551 = vadd.f32 0.0, %v550
  %v552 = vpop.f32.mrf.mxu0
  %553 = vmatprep.mubr.bf16.mxu0 0
  %554 = vmatmul.mubr.bf16.gmra.mxu0 %v463
  %v555 = vpop.f32.mrf.mxu0
  %v556 = vadd.f32 0.0, %v555
  %v557 = vpop.f32.mrf.mxu0
  %v558 = vpop.f32.mrf.mxu0
  %v559 = vadd.f32 0.0, %v558
  %v560 = vpop.f32.mrf.mxu0
  %561 = vmatprep.mubr.bf16.mxu0 0
  %562 = vmatmul.mubr.bf16.gmra.mxu0 %v464
  %v563 = vpop.f32.mrf.mxu0
  %v564 = vadd.f32 0.0, %v563
  %v565 = vpop.f32.mrf.mxu0
  %v566 = vpop.f32.mrf.mxu0
  %v567 = vadd.f32 0.0, %v566
  %v568 = vpop.f32.mrf.mxu0
  %569 = vdwg.mxu0
  %v570 = vpack.c.bf16 %v511, %v508
  %v571 = vpack.c.bf16 %v519, %v516
  %v572 = vpack.c.bf16 %v527, %v524
  %v573 = vpack.c.bf16 %v535, %v532
  %v574 = vpack.c.bf16 %v543, %v540
  %v575 = vpack.c.bf16 %v551, %v548
  %v576 = vpack.c.bf16 %v559, %v556
  %v577 = vpack.c.bf16 %v567, %v564
  %v578 = vld [vmem:[%s2] sm:$0xf]
  %v579 = vld [vmem:[%s2 + $0x4] sm:$0xf]
  %v580 = vld [vmem:[%s2 + $0x8] sm:$0xf]
  %v581 = vld [vmem:[%s2 + $0xc] sm:$0xf]
  %v582 = vld [vmem:[%s2 + $0x10] sm:$0xf]
  %v583 = vld [vmem:[%s2 + $0x14] sm:$0xf]
  %v584 = vld [vmem:[%s2 + $0x18] sm:$0xf]
  %v585 = vld [vmem:[%s2 + $0x1c] sm:$0xf]
  %v586 = vld [vmem:[%s2 + $0x20] sm:$0xf]
  %v587 = vld [vmem:[%s2 + $0x24] sm:$0xf]
  %v588 = vld [vmem:[%s2 + $0x28] sm:$0xf]
  %v589 = vld [vmem:[%s2 + $0x2c] sm:$0xf]
  %v590 = vld [vmem:[%s2 + $0x30] sm:$0xf]
  %v591 = vld [vmem:[%s2 + $0x34] sm:$0xf]
  %v592 = vld [vmem:[%s2 + $0x38] sm:$0xf]
  %v593 = vld [vmem:[%s2 + $0x3c] sm:$0xf]
  %v610 = vunpack.c.l.b16 %v578
  %v611 = vunpack.c.l.b16 %v579
  %v612 = vunpack.c.l.b16 %v580
  %v613 = vunpack.c.l.b16 %v581
  %v614 = vunpack.c.l.b16 %v582
  %v615 = vunpack.c.l.b16 %v583
  %v616 = vunpack.c.l.b16 %v584
  %v617 = vunpack.c.l.b16 %v585
  %v618 = vunpack.c.l.b16 %v586
  %v619 = vunpack.c.l.b16 %v587
  %v620 = vunpack.c.l.b16 %v588
  %v621 = vunpack.c.l.b16 %v589
  %v622 = vunpack.c.l.b16 %v590
  %v623 = vunpack.c.l.b16 %v591
  %v624 = vunpack.c.l.b16 %v592
  %v625 = vunpack.c.l.b16 %v593
  %v626 = vpack.c.b16 %v611, %v610
  %v627 = vpack.c.b16 %v613, %v612
  %v628 = vpack.c.b16 %v615, %v614
  %v629 = vpack.c.b16 %v617, %v616
  %v630 = vpack.c.b16 %v619, %v618
  %v631 = vpack.c.b16 %v621, %v620
  %v632 = vpack.c.b16 %v623, %v622
  %v633 = vpack.c.b16 %v625, %v624
  %642 = vmatprep.subr.bf16.mxu0 0
  %643 = vmatpush1.bf16.msra.mxu0 %v633
  %644 = vmatprep.subr.bf16.mxu0 0
  %645 = vmatpush1.bf16.msra.mxu0 %v632
  %646 = vmatprep.subr.bf16.mxu0 0
  %647 = vmatpush1.bf16.msra.mxu0 %v631
  %648 = vmatprep.subr.bf16.mxu0 0
  %649 = vmatpush1.bf16.msra.mxu0 %v630
  %650 = vmatprep.subr.bf16.mxu0 0
  %651 = vmatpush1.bf16.msra.mxu0 %v629
  %652 = vmatprep.subr.bf16.mxu0 0
  %653 = vmatpush1.bf16.msra.mxu0 %v628
  %654 = vmatprep.subr.bf16.mxu0 0
  %655 = vmatpush1.bf16.msra.mxu0 %v627
  %656 = vmatprep.subr.bf16.mxu0 0
  %657 = vmatpush1.bf16.msra.mxu0 %v626
  %658 = vmatprep.subr.bf16.mxu0 0
  %659 = vmatpush2.bf16.msra.mxu0 0
  %660 = vmatprep.subr.bf16.mxu0 0
  %661 = vmatpush2.bf16.msra.mxu0 0
  %662 = vmatprep.subr.bf16.mxu0 0
  %663 = vmatpush2.bf16.msra.mxu0 0
  %664 = vmatprep.subr.bf16.mxu0 0
  %665 = vmatpush2.bf16.msra.mxu0 0
  %666 = vmatprep.subr.bf16.mxu0 0
  %667 = vmatpush2.bf16.msra.mxu0 0
  %668 = vmatprep.subr.bf16.mxu0 0
  %669 = vmatpush2.bf16.msra.mxu0 0
  %670 = vmatprep.subr.bf16.mxu0 0
  %671 = vmatpush2.bf16.msra.mxu0 0
  %672 = vmatprep.subr.bf16.mxu0 0
  %673 = vmatpush2.bf16.msra.mxu0 0
  %674 = vmatprep.mubr.bf16.mxu0 0
  %675 = vmatmul.mubr.bf16.gmra.mxu0 %v570
  %v676 = vpop.f32.mrf.mxu0
  %v677 = vadd.f32 0.0, %v676
  %v678 = vpop.f32.mrf.mxu0
  %v679 = vpop.f32.mrf.mxu0
  %v680 = vadd.f32 0.0, %v679
  %v681 = vpop.f32.mrf.mxu0
  %682 = vmatprep.mubr.bf16.mxu0 0
  %683 = vmatmul.mubr.bf16.gmra.mxu0 %v571
  %v684 = vpop.f32.mrf.mxu0
  %v685 = vadd.f32 0.0, %v684
  %v686 = vpop.f32.mrf.mxu0
  %v687 = vpop.f32.mrf.mxu0
  %v688 = vadd.f32 0.0, %v687
  %v689 = vpop.f32.mrf.mxu0
  %690 = vmatprep.mubr.bf16.mxu0 0
  %691 = vmatmul.mubr.bf16.gmra.mxu0 %v572
  %v692 = vpop.f32.mrf.mxu0
  %v693 = vadd.f32 0.0, %v692
  %v694 = vpop.f32.mrf.mxu0
  %v695 = vpop.f32.mrf.mxu0
  %v696 = vadd.f32 0.0, %v695
  %v697 = vpop.f32.mrf.mxu0
  %698 = vmatprep.mubr.bf16.mxu0 0
  %699 = vmatmul.mubr.bf16.gmra.mxu0 %v573
  %v700 = vpop.f32.mrf.mxu0
  %v701 = vadd.f32 0.0, %v700
  %v702 = vpop.f32.mrf.mxu0
  %v703 = vpop.f32.mrf.mxu0
  %v704 = vadd.f32 0.0, %v703
  %v705 = vpop.f32.mrf.mxu0
  %706 = vmatprep.mubr.bf16.mxu0 0
  %707 = vmatmul.mubr.bf16.gmra.mxu0 %v574
  %v708 = vpop.f32.mrf.mxu0
  %v709 = vadd.f32 0.0, %v708
  %v710 = vpop.f32.mrf.mxu0
  %v711 = vpop.f32.mrf.mxu0
  %v712 = vadd.f32 0.0, %v711
  %v713 = vpop.f32.mrf.mxu0
  %714 = vmatprep.mubr.bf16.mxu0 0
  %715 = vmatmul.mubr.bf16.gmra.mxu0 %v575
  %v716 = vpop.f32.mrf.mxu0
  %v717 = vadd.f32 0.0, %v716
  %v718 = vpop.f32.mrf.mxu0
  %v719 = vpop.f32.mrf.mxu0
  %v720 = vadd.f32 0.0, %v719
  %v721 = vpop.f32.mrf.mxu0
  %722 = vmatprep.mubr.bf16.mxu0 0
  %723 = vmatmul.mubr.bf16.gmra.mxu0 %v576
  %v724 = vpop.f32.mrf.mxu0
  %v725 = vadd.f32 0.0, %v724
  %v726 = vpop.f32.mrf.mxu0
  %v727 = vpop.f32.mrf.mxu0
  %v728 = vadd.f32 0.0, %v727
  %v729 = vpop.f32.mrf.mxu0
  %730 = vmatprep.mubr.bf16.mxu0 0
  %731 = vmatmul.mubr.bf16.gmra.mxu0 %v577
  %v732 = vpop.f32.mrf.mxu0
  %v733 = vadd.f32 0.0, %v732
  %v734 = vpop.f32.mrf.mxu0
  %v735 = vpop.f32.mrf.mxu0
  %v736 = vadd.f32 0.0, %v735
  %v737 = vpop.f32.mrf.mxu0
  %738 = vdwg.mxu0
  %s739 = scalar_lea.vmem [#allocation2], 128
  %740 = vst [vmem:[%s739] sm:$0xff] %v677
  %741 = vst [vmem:[%s739 + $0x8] sm:$0xff] %v680
  %742 = vst [vmem:[%s739 + $0x10] sm:$0xff] %v685
  %743 = vst [vmem:[%s739 + $0x18] sm:$0xff] %v688
  %744 = vst [vmem:[%s739 + $0x20] sm:$0xff] %v693
  %745 = vst [vmem:[%s739 + $0x28] sm:$0xff] %v696
  %746 = vst [vmem:[%s739 + $0x30] sm:$0xff] %v701
  %747 = vst [vmem:[%s739 + $0x38] sm:$0xff] %v704
  %748 = vst [vmem:[%s739 + $0x40] sm:$0xff] %v709
  %749 = vst [vmem:[%s739 + $0x48] sm:$0xff] %v712
  %750 = vst [vmem:[%s739 + $0x50] sm:$0xff] %v717
  %751 = vst [vmem:[%s739 + $0x58] sm:$0xff] %v720
  %752 = vst [vmem:[%s739 + $0x60] sm:$0xff] %v725
  %753 = vst [vmem:[%s739 + $0x68] sm:$0xff] %v728
  %754 = vst [vmem:[%s739 + $0x70] sm:$0xff] %v733
  %755 = vst [vmem:[%s739 + $0x78] sm:$0xff] %v736
  %v756 = vld [vmem:[%s739] sm:$0xff]
  %v757 = vld [vmem:[%s739 + $0x8] sm:$0xff]
  %v758 = vld [vmem:[%s739 + $0x10] sm:$0xff]
  %v759 = vld [vmem:[%s739 + $0x18] sm:$0xff]
  %v760 = vld [vmem:[%s739 + $0x20] sm:$0xff]
  %v761 = vld [vmem:[%s739 + $0x28] sm:$0xff]
  %v762 = vld [vmem:[%s739 + $0x30] sm:$0xff]
  %v763 = vld [vmem:[%s739 + $0x38] sm:$0xff]
  %v764 = vld [vmem:[%s739 + $0x40] sm:$0xff]
  %v765 = vld [vmem:[%s739 + $0x48] sm:$0xff]
  %v766 = vld [vmem:[%s739 + $0x50] sm:$0xff]
  %v767 = vld [vmem:[%s739 + $0x58] sm:$0xff]
  %v768 = vld [vmem:[%s739 + $0x60] sm:$0xff]
  %v769 = vld [vmem:[%s739 + $0x68] sm:$0xff]
  %v770 = vld [vmem:[%s739 + $0x70] sm:$0xff]
  %v771 = vld [vmem:[%s739 + $0x78] sm:$0xff]
  %v772 = vld [vmem:[%s0] sm:$0xf]
  %v773 = vld [vmem:[%s0 + $0x4] sm:$0xf]
  %v774 = vld [vmem:[%s0 + $0x8] sm:$0xf]
  %v775 = vld [vmem:[%s0 + $0xc] sm:$0xf]
  %v776 = vld [vmem:[%s0 + $0x10] sm:$0xf]
  %v777 = vld [vmem:[%s0 + $0x14] sm:$0xf]
  %v778 = vld [vmem:[%s0 + $0x18] sm:$0xf]
  %v779 = vld [vmem:[%s0 + $0x1c] sm:$0xf]
  %v780 = vld [vmem:[%s0 + $0x20] sm:$0xf]
  %v781 = vld [vmem:[%s0 + $0x24] sm:$0xf]
  %v782 = vld [vmem:[%s0 + $0x28] sm:$0xf]
  %v783 = vld [vmem:[%s0 + $0x2c] sm:$0xf]
  %v784 = vld [vmem:[%s0 + $0x30] sm:$0xf]
  %v785 = vld [vmem:[%s0 + $0x34] sm:$0xf]
  %v786 = vld [vmem:[%s0 + $0x38] sm:$0xf]
  %v787 = vld [vmem:[%s0 + $0x3c] sm:$0xf]
  %v788 = vpack.c.bf16 %v757, %v756
  %v789 = vpack.c.bf16 %v759, %v758
  %v790 = vpack.c.bf16 %v761, %v760
  %v791 = vpack.c.bf16 %v763, %v762
  %v792 = vpack.c.bf16 %v765, %v764
  %v793 = vpack.c.bf16 %v767, %v766
  %v794 = vpack.c.bf16 %v769, %v768
  %v795 = vpack.c.bf16 %v771, %v770
  %v812 = vunpack.c.l.b16 %v772
  %v813 = vunpack.c.l.b16 %v773
  %v814 = vunpack.c.l.b16 %v774
  %v815 = vunpack.c.l.b16 %v775
  %v816 = vunpack.c.l.b16 %v776
  %v817 = vunpack.c.l.b16 %v777
  %v818 = vunpack.c.l.b16 %v778
  %v819 = vunpack.c.l.b16 %v779
  %v820 = vunpack.c.l.b16 %v780
  %v821 = vunpack.c.l.b16 %v781
  %v822 = vunpack.c.l.b16 %v782
  %v823 = vunpack.c.l.b16 %v783
  %v824 = vunpack.c.l.b16 %v784
  %v825 = vunpack.c.l.b16 %v785
  %v826 = vunpack.c.l.b16 %v786
  %v827 = vunpack.c.l.b16 %v787
  %v828 = vpack.c.b16 %v813, %v812
  %v829 = vpack.c.b16 %v815, %v814
  %v830 = vpack.c.b16 %v817, %v816
  %v831 = vpack.c.b16 %v819, %v818
  %v832 = vpack.c.b16 %v821, %v820
  %v833 = vpack.c.b16 %v823, %v822
  %v834 = vpack.c.b16 %v825, %v824
  %v835 = vpack.c.b16 %v827, %v826
  %844 = vmatprep.subr.bf16.mxu0 0
  %845 = vmatpush1.bf16.msra.mxu0 %v795
  %846 = vmatprep.subr.bf16.mxu0 0
  %847 = vmatpush1.bf16.msra.mxu0 %v794
  %848 = vmatprep.subr.bf16.mxu0 0
  %849 = vmatpush1.bf16.msra.mxu0 %v793
  %850 = vmatprep.subr.bf16.mxu0 0
  %851 = vmatpush1.bf16.msra.mxu0 %v792
  %852 = vmatprep.subr.bf16.mxu0 0
  %853 = vmatpush1.bf16.msra.mxu0 %v791
  %854 = vmatprep.subr.bf16.mxu0 0
  %855 = vmatpush1.bf16.msra.mxu0 %v790
  %856 = vmatprep.subr.bf16.mxu0 0
  %857 = vmatpush1.bf16.msra.mxu0 %v789
  %858 = vmatprep.subr.bf16.mxu0 0
  %859 = vmatpush1.bf16.msra.mxu0 %v788
  %860 = vmatprep.subr.bf16.mxu0 0
  %861 = vmatpush2.bf16.msra.mxu0 0
  %862 = vmatprep.subr.bf16.mxu0 0
  %863 = vmatpush2.bf16.msra.mxu0 0
  %864 = vmatprep.subr.bf16.mxu0 0
  %865 = vmatpush2.bf16.msra.mxu0 0
  %866 = vmatprep.subr.bf16.mxu0 0
  %867 = vmatpush2.bf16.msra.mxu0 0
  %868 = vmatprep.subr.bf16.mxu0 0
  %869 = vmatpush2.bf16.msra.mxu0 0
  %870 = vmatprep.subr.bf16.mxu0 0
  %871 = vmatpush2.bf16.msra.mxu0 0
  %872 = vmatprep.subr.bf16.mxu0 0
  %873 = vmatpush2.bf16.msra.mxu0 0
  %874 = vmatprep.subr.bf16.mxu0 0
  %875 = vmatpush2.bf16.msra.mxu0 0
  %876 = vmatprep.mubr.bf16.mxu0 0
  %877 = vmatmul.mubr.bf16.gmra.mxu0 %v828
  %v878 = vpop.f32.mrf.mxu0
  %v879 = vadd.f32 0.0, %v878
  %v880 = vpop.f32.mrf.mxu0
  %v881 = vpop.f32.mrf.mxu0
  %v882 = vadd.f32 0.0, %v881
  %v883 = vpop.f32.mrf.mxu0
  %884 = vmatprep.mubr.bf16.mxu0 0
  %885 = vmatmul.mubr.bf16.gmra.mxu0 %v829
  %v886 = vpop.f32.mrf.mxu0
  %v887 = vadd.f32 0.0, %v886
  %v888 = vpop.f32.mrf.mxu0
  %v889 = vpop.f32.mrf.mxu0
  %v890 = vadd.f32 0.0, %v889
  %v891 = vpop.f32.mrf.mxu0
  %892 = vmatprep.mubr.bf16.mxu0 0
  %893 = vmatmul.mubr.bf16.gmra.mxu0 %v830
  %v894 = vpop.f32.mrf.mxu0
  %v895 = vadd.f32 0.0, %v894
  %v896 = vpop.f32.mrf.mxu0
  %v897 = vpop.f32.mrf.mxu0
  %v898 = vadd.f32 0.0, %v897
  %v899 = vpop.f32.mrf.mxu0
  %900 = vmatprep.mubr.bf16.mxu0 0
  %901 = vmatmul.mubr.bf16.gmra.mxu0 %v831
  %v902 = vpop.f32.mrf.mxu0
  %v903 = vadd.f32 0.0, %v902
  %v904 = vpop.f32.mrf.mxu0
  %v905 = vpop.f32.mrf.mxu0
  %v906 = vadd.f32 0.0, %v905
  %v907 = vpop.f32.mrf.mxu0
  %908 = vmatprep.mubr.bf16.mxu0 0
  %909 = vmatmul.mubr.bf16.gmra.mxu0 %v832
  %v910 = vpop.f32.mrf.mxu0
  %v911 = vadd.f32 0.0, %v910
  %v912 = vpop.f32.mrf.mxu0
  %v913 = vpop.f32.mrf.mxu0
  %v914 = vadd.f32 0.0, %v913
  %v915 = vpop.f32.mrf.mxu0
  %916 = vmatprep.mubr.bf16.mxu0 0
  %917 = vmatmul.mubr.bf16.gmra.mxu0 %v833
  %v918 = vpop.f32.mrf.mxu0
  %v919 = vadd.f32 0.0, %v918
  %v920 = vpop.f32.mrf.mxu0
  %v921 = vpop.f32.mrf.mxu0
  %v922 = vadd.f32 0.0, %v921
  %v923 = vpop.f32.mrf.mxu0
  %924 = vmatprep.mubr.bf16.mxu0 0
  %925 = vmatmul.mubr.bf16.gmra.mxu0 %v834
  %v926 = vpop.f32.mrf.mxu0
  %v927 = vadd.f32 0.0, %v926
  %v928 = vpop.f32.mrf.mxu0
  %v929 = vpop.f32.mrf.mxu0
  %v930 = vadd.f32 0.0, %v929
  %v931 = vpop.f32.mrf.mxu0
  %932 = vmatprep.mubr.bf16.mxu0 0
  %933 = vmatmul.mubr.bf16.gmra.mxu0 %v835
  %v934 = vpop.f32.mrf.mxu0
  %v935 = vadd.f32 0.0, %v934
  %v936 = vpop.f32.mrf.mxu0
  %v937 = vpop.f32.mrf.mxu0
  %v938 = vadd.f32 0.0, %v937
  %v939 = vpop.f32.mrf.mxu0
  %940 = vdwg.mxu0
  %v941 = vpack.c.bf16 %v882, %v879
  %v942 = vpack.c.bf16 %v890, %v887
  %v943 = vpack.c.bf16 %v898, %v895
  %v944 = vpack.c.bf16 %v906, %v903
  %v945 = vpack.c.bf16 %v914, %v911
  %v946 = vpack.c.bf16 %v922, %v919
  %v947 = vpack.c.bf16 %v930, %v927
  %v948 = vpack.c.bf16 %v938, %v935
  %v949 = vld [vmem:[%s2] sm:$0xf]
  %v950 = vld [vmem:[%s2 + $0x4] sm:$0xf]
  %v951 = vld [vmem:[%s2 + $0x8] sm:$0xf]
  %v952 = vld [vmem:[%s2 + $0xc] sm:$0xf]
  %v953 = vld [vmem:[%s2 + $0x10] sm:$0xf]
  %v954 = vld [vmem:[%s2 + $0x14] sm:$0xf]
  %v955 = vld [vmem:[%s2 + $0x18] sm:$0xf]
  %v956 = vld [vmem:[%s2 + $0x1c] sm:$0xf]
  %v957 = vld [vmem:[%s2 + $0x20] sm:$0xf]
  %v958 = vld [vmem:[%s2 + $0x24] sm:$0xf]
  %v959 = vld [vmem:[%s2 + $0x28] sm:$0xf]
  %v960 = vld [vmem:[%s2 + $0x2c] sm:$0xf]
  %v961 = vld [vmem:[%s2 + $0x30] sm:$0xf]
  %v962 = vld [vmem:[%s2 + $0x34] sm:$0xf]
  %v963 = vld [vmem:[%s2 + $0x38] sm:$0xf]
  %v964 = vld [vmem:[%s2 + $0x3c] sm:$0xf]
  %v981 = vunpack.c.l.b16 %v949
  %v982 = vunpack.c.l.b16 %v950
  %v983 = vunpack.c.l.b16 %v951
  %v984 = vunpack.c.l.b16 %v952
  %v985 = vunpack.c.l.b16 %v953
  %v986 = vunpack.c.l.b16 %v954
  %v987 = vunpack.c.l.b16 %v955
  %v988 = vunpack.c.l.b16 %v956
  %v989 = vunpack.c.l.b16 %v957
  %v990 = vunpack.c.l.b16 %v958
  %v991 = vunpack.c.l.b16 %v959
  %v992 = vunpack.c.l.b16 %v960
  %v993 = vunpack.c.l.b16 %v961
  %v994 = vunpack.c.l.b16 %v962
  %v995 = vunpack.c.l.b16 %v963
  %v996 = vunpack.c.l.b16 %v964
  %v997 = vpack.c.b16 %v982, %v981
  %v998 = vpack.c.b16 %v984, %v983
  %v999 = vpack.c.b16 %v986, %v985
  %v1000 = vpack.c.b16 %v988, %v987
  %v1001 = vpack.c.b16 %v990, %v989
  %v1002 = vpack.c.b16 %v992, %v991
  %v1003 = vpack.c.b16 %v994, %v993
  %v1004 = vpack.c.b16 %v996, %v995
  %1013 = vmatprep.subr.bf16.mxu0 0
  %1014 = vmatpush1.bf16.msra.mxu0 %v1004
  %1015 = vmatprep.subr.bf16.mxu0 0
  %1016 = vmatpush1.bf16.msra.mxu0 %v1003
  %1017 = vmatprep.subr.bf16.mxu0 0
  %1018 = vmatpush1.bf16.msra.mxu0 %v1002
  %1019 = vmatprep.subr.bf16.mxu0 0
  %1020 = vmatpush1.bf16.msra.mxu0 %v1001
  %1021 = vmatprep.subr.bf16.mxu0 0
  %1022 = vmatpush1.bf16.msra.mxu0 %v1000
  %1023 = vmatprep.subr.bf16.mxu0 0
  %1024 = vmatpush1.bf16.msra.mxu0 %v999
  %1025 = vmatprep.subr.bf16.mxu0 0
  %1026 = vmatpush1.bf16.msra.mxu0 %v998
  %1027 = vmatprep.subr.bf16.mxu0 0
  %1028 = vmatpush1.bf16.msra.mxu0 %v997
  %1029 = vmatprep.subr.bf16.mxu0 0
  %1030 = vmatpush2.bf16.msra.mxu0 0
  %1031 = vmatprep.subr.bf16.mxu0 0
  %1032 = vmatpush2.bf16.msra.mxu0 0
  %1033 = vmatprep.subr.bf16.mxu0 0
  %1034 = vmatpush2.bf16.msra.mxu0 0
  %1035 = vmatprep.subr.bf16.mxu0 0
  %1036 = vmatpush2.bf16.msra.mxu0 0
  %1037 = vmatprep.subr.bf16.mxu0 0
  %1038 = vmatpush2.bf16.msra.mxu0 0
  %1039 = vmatprep.subr.bf16.mxu0 0
  %1040 = vmatpush2.bf16.msra.mxu0 0
  %1041 = vmatprep.subr.bf16.mxu0 0
  %1042 = vmatpush2.bf16.msra.mxu0 0
  %1043 = vmatprep.subr.bf16.mxu0 0
  %1044 = vmatpush2.bf16.msra.mxu0 0
  %1045 = vmatprep.mubr.bf16.mxu0 0
  %1046 = vmatmul.mubr.bf16.gmra.mxu0 %v941
  %v1047 = vpop.f32.mrf.mxu0
  %v1048 = vadd.f32 0.0, %v1047
  %v1049 = vpop.f32.mrf.mxu0
  %v1050 = vpop.f32.mrf.mxu0
  %v1051 = vadd.f32 0.0, %v1050
  %v1052 = vpop.f32.mrf.mxu0
  %1053 = vmatprep.mubr.bf16.mxu0 0
  %1054 = vmatmul.mubr.bf16.gmra.mxu0 %v942
  %v1055 = vpop.f32.mrf.mxu0
  %v1056 = vadd.f32 0.0, %v1055
  %v1057 = vpop.f32.mrf.mxu0
  %v1058 = vpop.f32.mrf.mxu0
  %v1059 = vadd.f32 0.0, %v1058
  %v1060 = vpop.f32.mrf.mxu0
  %1061 = vmatprep.mubr.bf16.mxu0 0
  %1062 = vmatmul.mubr.bf16.gmra.mxu0 %v943
  %v1063 = vpop.f32.mrf.mxu0
  %v1064 = vadd.f32 0.0, %v1063
  %v1065 = vpop.f32.mrf.mxu0
  %v1066 = vpop.f32.mrf.mxu0
  %v1067 = vadd.f32 0.0, %v1066
  %v1068 = vpop.f32.mrf.mxu0
  %1069 = vmatprep.mubr.bf16.mxu0 0
  %1070 = vmatmul.mubr.bf16.gmra.mxu0 %v944
  %v1071 = vpop.f32.mrf.mxu0
  %v1072 = vadd.f32 0.0, %v1071
  %v1073 = vpop.f32.mrf.mxu0
  %v1074 = vpop.f32.mrf.mxu0
  %v1075 = vadd.f32 0.0, %v1074
  %v1076 = vpop.f32.mrf.mxu0
  %1077 = vmatprep.mubr.bf16.mxu0 0
  %1078 = vmatmul.mubr.bf16.gmra.mxu0 %v945
  %v1079 = vpop.f32.mrf.mxu0
  %v1080 = vadd.f32 0.0, %v1079
  %v1081 = vpop.f32.mrf.mxu0
  %v1082 = vpop.f32.mrf.mxu0
  %v1083 = vadd.f32 0.0, %v1082
  %v1084 = vpop.f32.mrf.mxu0
  %1085 = vmatprep.mubr.bf16.mxu0 0
  %1086 = vmatmul.mubr.bf16.gmra.mxu0 %v946
  %v1087 = vpop.f32.mrf.mxu0
  %v1088 = vadd.f32 0.0, %v1087
  %v1089 = vpop.f32.mrf.mxu0
  %v1090 = vpop.f32.mrf.mxu0
  %v1091 = vadd.f32 0.0, %v1090
  %v1092 = vpop.f32.mrf.mxu0
  %1093 = vmatprep.mubr.bf16.mxu0 0
  %1094 = vmatmul.mubr.bf16.gmra.mxu0 %v947
  %v1095 = vpop.f32.mrf.mxu0
  %v1096 = vadd.f32 0.0, %v1095
  %v1097 = vpop.f32.mrf.mxu0
  %v1098 = vpop.f32.mrf.mxu0
  %v1099 = vadd.f32 0.0, %v1098
  %v1100 = vpop.f32.mrf.mxu0
  %1101 = vmatprep.mubr.bf16.mxu0 0
  %1102 = vmatmul.mubr.bf16.gmra.mxu0 %v948
  %v1103 = vpop.f32.mrf.mxu0
  %v1104 = vadd.f32 0.0, %v1103
  %v1105 = vpop.f32.mrf.mxu0
  %v1106 = vpop.f32.mrf.mxu0
  %v1107 = vadd.f32 0.0, %v1106
  %v1108 = vpop.f32.mrf.mxu0
  %1109 = vdwg.mxu0
  %1110 = vst [vmem:[%s3] sm:$0xff] %v1048
  %1111 = vst [vmem:[%s3 + $0x8] sm:$0xff] %v1051
  %1112 = vst [vmem:[%s3 + $0x10] sm:$0xff] %v1056
  %1113 = vst [vmem:[%s3 + $0x18] sm:$0xff] %v1059
  %1114 = vst [vmem:[%s3 + $0x20] sm:$0xff] %v1064
  %1115 = vst [vmem:[%s3 + $0x28] sm:$0xff] %v1067
  %1116 = vst [vmem:[%s3 + $0x30] sm:$0xff] %v1072
  %1117 = vst [vmem:[%s3 + $0x38] sm:$0xff] %v1075
  %1118 = vst [vmem:[%s3 + $0x40] sm:$0xff] %v1080
  %1119 = vst [vmem:[%s3 + $0x48] sm:$0xff] %v1083
  %1120 = vst [vmem:[%s3 + $0x50] sm:$0xff] %v1088
  %1121 = vst [vmem:[%s3 + $0x58] sm:$0xff] %v1091
  %1122 = vst [vmem:[%s3 + $0x60] sm:$0xff] %v1096
  %1123 = vst [vmem:[%s3 + $0x68] sm:$0xff] %v1099
  %1124 = vst [vmem:[%s3 + $0x70] sm:$0xff] %v1104
  %1125 = vst [vmem:[%s3 + $0x78] sm:$0xff] %v1107
  // Predicated region
  $region14: #{gcn_forward.1} parent=0 // pred_check
    _
  $region15: #{gcn_forward.1} parent=0 // pred_check_branch
    %1127 = sbr.rel (0) target = $region17
  $region16: #{gcn_forward.1} parent=0 // pred_region
    _
  $region17: #{gcn_forward.1} parent=0 // pred_fallthru
    _
  // Predicated region
  $region18: #{gcn_forward.1} parent=0 // pred_check
    _
  $region19: #{gcn_forward.1} parent=0 // pred_check_branch
    %1129 = sbr.rel (0) target = $region21
  $region20: #{gcn_forward.1} parent=0 // pred_region
    _
  $region21: #{gcn_forward.1} parent=0 // pred_fallthru
    _

</llo_original>
